<compile_context>
chip_gen: v5e
topology: v5e:2x2
jax: 0.10.0
libtpu: 0.0.40
codegen_flags: <defaults>
</compile_context>

<pallas_src>
import numpy as np

import jax
import jax.numpy as jnp
from jax.experimental import pallas as pl
from jax.experimental.pallas import tpu as pltpu

# ---------------- small synthetic configuration ----------------
B = 2             # batch
HIS_TS = 8        # his_ts  (input time steps)
PRE_TS = 4        # pre_ts  (predicted time steps)
N_NODE = 8        # num_node
INPUT_DIM = 4     # input_dim (features per node per step)
H_LOW = 16        # hidden_dim_low  -> 2H=32, 6H=96, 4H=64
NUM_CONTEXT = 5   # num_context
PRE_NUM = 4       # pre_num
POI_DIM = 16      # poi feature dim (for simplified poi->flow head)
DECOMP_KERNEL = 5 # decomp_kernel (odd, Autoformer-style replicate padding)

BN = B * N_NODE            # 16  (batch*node "series" count)
ROWS = BN * HIS_TS         # 128 (MXU-friendly M dimension)
PRED_ROWS = BN * PRE_TS    # 64


def _moving_avg_matrix_np(t, k):
    """(T, T) matrix applying the replicate-padded moving average along T.

    Equivalent to Autoformer series_decomp's AvgPool1d with repeated end points.
    Built with numpy at trace time -> baked in as a constant.
    """
    pad = (k - 1) // 2
    a = np.zeros((t, t), np.float32)
    for i in range(t):
        for off in range(-pad, pad + 1):
            a[i, min(max(i + off, 0), t - 1)] += 1.0 / k
    return a


# ---------------- single fused Pallas kernel (one grid step) ----------------
def _fused_kernel(x_ref, ablk_ref, wh_ref, wl_ref, bcmb_ref,
                  w1_ref, b1_ref, w2_ref, b2_ref, w3_ref, b3_ref,
                  wtm_ref, btm_ref, mavg_ref, wcx_ref, bcx_ref, p2f_ref,
                  pred_ref, ctx_ref, sse_ref):
    """Whole problem in VMEM: (ROWS=B*N*T, D) in ->
       pred (B*N*PRE_TS, PRE_NUM), context probs (B*N, NUM_CONTEXT), SSE (1,1)."""
    f32 = jnp.float32
    x = x_ref[...]                                                    # (128, D)

    # --- series decomposition: block-diag moving average, one MXU matmul ---
    high = jnp.dot(ablk_ref[...], x, preferred_element_type=f32)      # moving mean
    low = x - high                                                    # residual

    # --- low/high encoders, (1.0*high_out + 0.5*low_out) folded into weights ---
    combined = (jnp.dot(high, wh_ref[...], preferred_element_type=f32)
                + jnp.dot(low, wl_ref[...], preferred_element_type=f32)
                + bcmb_ref[...])                                      # (128, 2H)

    # --- predict MLP (Linear-ReLU-Linear-ReLU-Linear) ---
    h1 = jnp.maximum(
        jnp.dot(combined, w1_ref[...], preferred_element_type=f32) + b1_ref[...], 0.0)
    h2 = jnp.maximum(
        jnp.dot(h1, w2_ref[...], preferred_element_type=f32) + b2_ref[...], 0.0)
    mlp = jnp.dot(h2, w3_ref[...], preferred_element_type=f32) + b3_ref[...]   # (128, PRE_NUM)

    # --- time-mixing conv (nn.Linear(his_ts, pre_ts)) as block-diag matmul ---
    pred = (jnp.dot(wtm_ref[...], mlp, preferred_element_type=f32)
            + btm_ref[...])                                           # (64, PRE_NUM)
    pred_ref[...] = pred.astype(pred_ref.dtype)

    # --- simplified High_Encoder context head: per-series softmax over contexts ---
    ctx_in = jnp.dot(mavg_ref[...], high, preferred_element_type=f32)  # (BN, D) mean over T
    logits = (jnp.dot(ctx_in, wcx_ref[...], preferred_element_type=f32)
              + bcx_ref[...])                                          # (BN, NUM_CONTEXT)
    logits = logits - jnp.max(logits, axis=-1, keepdims=True)
    e = jnp.exp(logits)
    ctx_ref[...] = (e / jnp.sum(e, axis=-1, keepdims=True)).astype(ctx_ref.dtype)

    # --- simplified Low_Encoder poi->flow reconstruction: SSE partial ---
    diff = p2f_ref[...] - low                                          # (128, D)
    sse_ref[...] = jnp.sum(diff * diff, axis=(0, 1), keepdims=True).astype(sse_ref.dtype)


def _full2d(shape):
    """Full-array (resident) BlockSpec for a small 2-D array, single grid step."""
    return pl.BlockSpec(shape, lambda i: (0, 0))


# ---------------- params ----------------
def _linear_params(key, fan_in, fan_out):
    kw, kb = jax.random.split(key)
    bound = 1.0 / (fan_in ** 0.5)
    w = jax.random.uniform(kw, (fan_in, fan_out), jnp.float32, -bound, bound)
    b = jax.random.uniform(kb, (1, fan_out), jnp.float32, -bound, bound)
    return w, b


def init_params(key):
    keys = jax.random.split(key, 8)
    p = {}
    p["Wl"], p["bl"] = _linear_params(keys[0], INPUT_DIM, 2 * H_LOW)       # low encoder
    p["Wh"], p["bh"] = _linear_params(keys[1], INPUT_DIM, 2 * H_LOW)       # high encoder
    p["W1"], p["b1"] = _linear_params(keys[2], 2 * H_LOW, 6 * H_LOW)       # predict[0]
    p["W2"], p["b2"] = _linear_params(keys[3], 6 * H_LOW, 4 * H_LOW)       # predict[3]
    p["W3"], p["b3"] = _linear_params(keys[4], 4 * H_LOW, PRE_NUM)         # predict[6]
    p["Wc"], p["bc"] = _linear_params(keys[5], HIS_TS, PRE_TS)             # self.conv
    p["Wctx"], p["bctx"] = _linear_params(keys[6], INPUT_DIM, NUM_CONTEXT) # context head
    p["Wp"], p["bp"] = _linear_params(keys[7], POI_DIM, INPUT_DIM)         # poi -> flow
    return p


# ---------------- forward ----------------
@jax.jit
def model_forward(x, poi, p):
    Bx, T, N, D = x.shape
    assert (Bx, T, N, D) == (B, HIS_TS, N_NODE, INPUT_DIM)

    # ---- trace-time constants (numpy -> baked in) ----
    a_blk = jnp.asarray(np.kron(np.eye(BN, dtype=np.float32),
                                _moving_avg_matrix_np(T, DECOMP_KERNEL)))   # (128, 128)
    m_avg = jnp.asarray(np.kron(np.eye(BN, dtype=np.float32),
                                np.full((1, T), 1.0 / T, np.float32)))      # (16, 128)

    # ---- tiny wrapper-side param plumbing (fused by XLA into input prep) ----
    wl_scaled = 0.5 * p["Wl"]                                         # fold b=0.5
    bcmb = p["bh"] + 0.5 * p["bl"]                                    # (1, 2H)
    wtm_blk = jnp.kron(jnp.eye(BN, dtype=jnp.float32), p["Wc"].T)     # (64, 128) block-diag
    btm_full = jnp.tile(p["bc"].reshape(PRE_TS, 1), (BN, 1))          # (64, 1)
    # poi -> flow head is 512 FLOPs: a pallas launch costs far more than the math.
    poi2flow = poi @ p["Wp"] + p["bp"]                                # (N, D)
    p2f_full = jnp.broadcast_to(poi2flow[None, :, None, :],
                                (Bx, N, T, D)).reshape(ROWS, D)       # (128, D)

    # One tiny (8 KiB) layout change so each series is a contiguous (T, D) row group.
    x2 = jnp.transpose(x, (0, 2, 1, 3)).reshape(ROWS, D)              # (128, D)

    operands = [x2, a_blk, p["Wh"], wl_scaled, bcmb,
                p["W1"], p["b1"], p["W2"], p["b2"], p["W3"], p["b3"],
                wtm_blk, btm_full, m_avg, p["Wctx"], p["bctx"], p2f_full]

    pred_flat, ctx_flat, sse = pl.pallas_call(
        _fused_kernel,
        out_shape=(
            jax.ShapeDtypeStruct((PRED_ROWS, PRE_NUM), jnp.float32),
            jax.ShapeDtypeStruct((BN, NUM_CONTEXT), jnp.float32),
            jax.ShapeDtypeStruct((1, 1), jnp.float32),
        ),
        grid=(1,),
        in_specs=[_full2d(op.shape) for op in operands],
        out_specs=(
            _full2d((PRED_ROWS, PRE_NUM)),
            _full2d((BN, NUM_CONTEXT)),
            _full2d((1, 1)),
        ),
        compiler_params=pltpu.CompilerParams(
            dimension_semantics=("arbitrary",)),
    )(*operands)

    # (B*N*PRE_TS, PRE_NUM) -> (B, N, PRE_TS, PRE_NUM) -> (B, PRE_TS, N, PRE_NUM)
    pred_output = jnp.transpose(
        pred_flat.reshape(Bx, N, PRE_TS, PRE_NUM), (0, 2, 1, 3))
    context_probs = ctx_flat.reshape(Bx, N, NUM_CONTEXT)
    construct_loss = sse[0, 0] / float(Bx * T * N * D)
    return pred_output, context_probs, construct_loss


if __name__ == "__main__":
    key = jax.random.PRNGKey(0)
    kx, kpoi, kparam = jax.random.split(key, 3)
    x = jax.random.normal(kx, (B, HIS_TS, N_NODE, INPUT_DIM), jnp.float32)
    poi = jax.random.normal(kpoi, (N_NODE, POI_DIM), jnp.float32)
    params = init_params(kparam)

    pred_output, context_probs, construct_loss = model_forward(x, poi, params)
    jax.block_until_ready((pred_output, context_probs, construct_loss))

    assert pred_output.shape == (B, PRE_TS, N_NODE, PRE_NUM), pred_output.shape
    assert context_probs.shape == (B, N_NODE, NUM_CONTEXT), context_probs.shape
    assert construct_loss.shape == (), construct_loss.shape
    assert bool(jnp.all(jnp.isfinite(pred_output)))
    assert bool(jnp.all(jnp.isfinite(context_probs)))
    assert bool(jnp.isfinite(construct_loss))
    # context probs should sum to ~1 per (batch, node)
    assert bool(jnp.allclose(jnp.sum(context_probs, axis=-1), 1.0, atol=1e-5))
    print("KERNEL_OK")
</pallas_src>

<mosaic_0001>
module attributes {stable_mosaic.version = 11 : i64} {
  func.func @_fused_kernel(%arg0: i32, %arg1: memref<128x4xf32, #tpu.memory_space<vmem>>, %arg2: memref<128x128xf32, #tpu.memory_space<vmem>>, %arg3: memref<4x32xf32, #tpu.memory_space<vmem>>, %arg4: memref<4x32xf32, #tpu.memory_space<vmem>>, %arg5: memref<1x32xf32, #tpu.memory_space<vmem>>, %arg6: memref<32x96xf32, #tpu.memory_space<vmem>>, %arg7: memref<1x96xf32, #tpu.memory_space<vmem>>, %arg8: memref<96x64xf32, #tpu.memory_space<vmem>>, %arg9: memref<1x64xf32, #tpu.memory_space<vmem>>, %arg10: memref<64x4xf32, #tpu.memory_space<vmem>>, %arg11: memref<1x4xf32, #tpu.memory_space<vmem>>, %arg12: memref<64x128xf32, #tpu.memory_space<vmem>>, %arg13: memref<64x1xf32, #tpu.memory_space<vmem>>, %arg14: memref<16x128xf32, #tpu.memory_space<vmem>>, %arg15: memref<4x5xf32, #tpu.memory_space<vmem>>, %arg16: memref<1x5xf32, #tpu.memory_space<vmem>>, %arg17: memref<128x4xf32, #tpu.memory_space<vmem>>, %arg18: memref<64x4xf32, #tpu.memory_space<vmem>>, %arg19: memref<16x5xf32, #tpu.memory_space<vmem>>, %arg20: memref<1x1xf32, #tpu.memory_space<vmem>>) attributes {dimension_semantics = [#tpu.dimension_semantics<arbitrary>], iteration_bounds = array<i64: 1>, scalar_prefetch = 0 : i64, scratch_operands = 0 : i64, tpu.core_type = #tpu.core_type<tc>, window_params = [{pipeline_mode = #tpu.pipeline_mode<synchronous>, transform_indices = @transform_0, window_bounds = array<i64: 128, 4>}, {pipeline_mode = #tpu.pipeline_mode<synchronous>, transform_indices = @transform_1, window_bounds = array<i64: 128, 128>}, {pipeline_mode = #tpu.pipeline_mode<synchronous>, transform_indices = @transform_2, window_bounds = array<i64: 4, 32>}, {pipeline_mode = #tpu.pipeline_mode<synchronous>, transform_indices = @transform_3, window_bounds = array<i64: 4, 32>}, {pipeline_mode = #tpu.pipeline_mode<synchronous>, transform_indices = @transform_4, window_bounds = array<i64: 1, 32>}, {pipeline_mode = #tpu.pipeline_mode<synchronous>, transform_indices = @transform_5, window_bounds = array<i64: 32, 96>}, {pipeline_mode = #tpu.pipeline_mode<synchronous>, transform_indices = @transform_6, window_bounds = array<i64: 1, 96>}, {pipeline_mode = #tpu.pipeline_mode<synchronous>, transform_indices = @transform_7, window_bounds = array<i64: 96, 64>}, {pipeline_mode = #tpu.pipeline_mode<synchronous>, transform_indices = @transform_8, window_bounds = array<i64: 1, 64>}, {pipeline_mode = #tpu.pipeline_mode<synchronous>, transform_indices = @transform_9, window_bounds = array<i64: 64, 4>}, {pipeline_mode = #tpu.pipeline_mode<synchronous>, transform_indices = @transform_10, window_bounds = array<i64: 1, 4>}, {pipeline_mode = #tpu.pipeline_mode<synchronous>, transform_indices = @transform_11, window_bounds = array<i64: 64, 128>}, {pipeline_mode = #tpu.pipeline_mode<synchronous>, transform_indices = @transform_12, window_bounds = array<i64: 64, 1>}, {pipeline_mode = #tpu.pipeline_mode<synchronous>, transform_indices = @transform_13, window_bounds = array<i64: 16, 128>}, {pipeline_mode = #tpu.pipeline_mode<synchronous>, transform_indices = @transform_14, window_bounds = array<i64: 4, 5>}, {pipeline_mode = #tpu.pipeline_mode<synchronous>, transform_indices = @transform_15, window_bounds = array<i64: 1, 5>}, {pipeline_mode = #tpu.pipeline_mode<synchronous>, transform_indices = @transform_16, window_bounds = array<i64: 128, 4>}, {pipeline_mode = #tpu.pipeline_mode<synchronous>, transform_indices = @transform_17, window_bounds = array<i64: 64, 4>}, {pipeline_mode = #tpu.pipeline_mode<synchronous>, transform_indices = @transform_18, window_bounds = array<i64: 16, 5>}, {pipeline_mode = #tpu.pipeline_mode<synchronous>, transform_indices = @transform_19, window_bounds = array<i64: 1, 1>}]} {
    %c0 = arith.constant 0 : index
    %c0_0 = arith.constant 0 : index
    %0 = vector.load %arg1[%c0, %c0_0] : memref<128x4xf32, #tpu.memory_space<vmem>>, vector<128x4xf32>
    %c0_1 = arith.constant 0 : index
    %c0_2 = arith.constant 0 : index
    %1 = vector.load %arg2[%c0_1, %c0_2] : memref<128x128xf32, #tpu.memory_space<vmem>>, vector<128x128xf32>
    %cst = arith.constant dense<0.000000e+00> : vector<128x4xf32>
    %2 = tpu.matmul %1, %0, %cst {dimension_numbers = #tpu.dot_dimension_numbers<[1], [0], [0], [1], [0, 0, 1, 1], [], []>} : vector<128x128xf32>, vector<128x4xf32>, vector<128x4xf32> -> vector<128x4xf32>
    %3 = arith.subf %0, %2 : vector<128x4xf32>
    %c0_3 = arith.constant 0 : index
    %c0_4 = arith.constant 0 : index
    %4 = vector.load %arg3[%c0_3, %c0_4] : memref<4x32xf32, #tpu.memory_space<vmem>>, vector<4x32xf32>
    %cst_5 = arith.constant dense<0.000000e+00> : vector<128x32xf32>
    %5 = tpu.matmul %2, %4, %cst_5 {dimension_numbers = #tpu.dot_dimension_numbers<[1], [0], [0], [1], [0, 0, 1, 1], [], []>} : vector<128x4xf32>, vector<4x32xf32>, vector<128x32xf32> -> vector<128x32xf32>
    %c0_6 = arith.constant 0 : index
    %c0_7 = arith.constant 0 : index
    %6 = vector.load %arg4[%c0_6, %c0_7] : memref<4x32xf32, #tpu.memory_space<vmem>>, vector<4x32xf32>
    %cst_8 = arith.constant dense<0.000000e+00> : vector<128x32xf32>
    %7 = tpu.matmul %3, %6, %cst_8 {dimension_numbers = #tpu.dot_dimension_numbers<[1], [0], [0], [1], [0, 0, 1, 1], [], []>} : vector<128x4xf32>, vector<4x32xf32>, vector<128x32xf32> -> vector<128x32xf32>
    %8 = arith.addf %5, %7 : vector<128x32xf32>
    %c0_9 = arith.constant 0 : index
    %c0_10 = arith.constant 0 : index
    %9 = vector.load %arg5[%c0_9, %c0_10] : memref<1x32xf32, #tpu.memory_space<vmem>>, vector<1x32xf32>
    %10 = vector.broadcast %9 : vector<1x32xf32> to vector<128x32xf32>
    %11 = arith.addf %8, %10 : vector<128x32xf32>
    %c0_11 = arith.constant 0 : index
    %c0_12 = arith.constant 0 : index
    %12 = vector.load %arg6[%c0_11, %c0_12] : memref<32x96xf32, #tpu.memory_space<vmem>>, vector<32x96xf32>
    %cst_13 = arith.constant dense<0.000000e+00> : vector<128x96xf32>
    %13 = tpu.matmul %11, %12, %cst_13 {dimension_numbers = #tpu.dot_dimension_numbers<[1], [0], [0], [1], [0, 0, 1, 1], [], []>} : vector<128x32xf32>, vector<32x96xf32>, vector<128x96xf32> -> vector<128x96xf32>
    %c0_14 = arith.constant 0 : index
    %c0_15 = arith.constant 0 : index
    %14 = vector.load %arg7[%c0_14, %c0_15] : memref<1x96xf32, #tpu.memory_space<vmem>>, vector<1x96xf32>
    %15 = vector.broadcast %14 : vector<1x96xf32> to vector<128x96xf32>
    %16 = arith.addf %13, %15 : vector<128x96xf32>
    %cst_16 = arith.constant 0.000000e+00 : f32
    %17 = vector.broadcast %cst_16 : f32 to vector<128x96xf32>
    %18 = arith.maximumf %16, %17 : vector<128x96xf32>
    %c0_17 = arith.constant 0 : index
    %c0_18 = arith.constant 0 : index
    %19 = vector.load %arg8[%c0_17, %c0_18] : memref<96x64xf32, #tpu.memory_space<vmem>>, vector<96x64xf32>
    %cst_19 = arith.constant dense<0.000000e+00> : vector<128x64xf32>
    %20 = tpu.matmul %18, %19, %cst_19 {dimension_numbers = #tpu.dot_dimension_numbers<[1], [0], [0], [1], [0, 0, 1, 1], [], []>} : vector<128x96xf32>, vector<96x64xf32>, vector<128x64xf32> -> vector<128x64xf32>
    %c0_20 = arith.constant 0 : index
    %c0_21 = arith.constant 0 : index
    %21 = vector.load %arg9[%c0_20, %c0_21] : memref<1x64xf32, #tpu.memory_space<vmem>>, vector<1x64xf32>
    %22 = vector.broadcast %21 : vector<1x64xf32> to vector<128x64xf32>
    %23 = arith.addf %20, %22 : vector<128x64xf32>
    %cst_22 = arith.constant 0.000000e+00 : f32
    %24 = vector.broadcast %cst_22 : f32 to vector<128x64xf32>
    %25 = arith.maximumf %23, %24 : vector<128x64xf32>
    %c0_23 = arith.constant 0 : index
    %c0_24 = arith.constant 0 : index
    %26 = vector.load %arg10[%c0_23, %c0_24] : memref<64x4xf32, #tpu.memory_space<vmem>>, vector<64x4xf32>
    %cst_25 = arith.constant dense<0.000000e+00> : vector<128x4xf32>
    %27 = tpu.matmul %25, %26, %cst_25 {dimension_numbers = #tpu.dot_dimension_numbers<[1], [0], [0], [1], [0, 0, 1, 1], [], []>} : vector<128x64xf32>, vector<64x4xf32>, vector<128x4xf32> -> vector<128x4xf32>
    %c0_26 = arith.constant 0 : index
    %c0_27 = arith.constant 0 : index
    %28 = vector.load %arg11[%c0_26, %c0_27] : memref<1x4xf32, #tpu.memory_space<vmem>>, vector<1x4xf32>
    %29 = vector.broadcast %28 : vector<1x4xf32> to vector<128x4xf32>
    %30 = arith.addf %27, %29 : vector<128x4xf32>
    %c0_28 = arith.constant 0 : index
    %c0_29 = arith.constant 0 : index
    %31 = vector.load %arg12[%c0_28, %c0_29] : memref<64x128xf32, #tpu.memory_space<vmem>>, vector<64x128xf32>
    %cst_30 = arith.constant dense<0.000000e+00> : vector<64x4xf32>
    %32 = tpu.matmul %31, %30, %cst_30 {dimension_numbers = #tpu.dot_dimension_numbers<[1], [0], [0], [1], [0, 0, 1, 1], [], []>} : vector<64x128xf32>, vector<128x4xf32>, vector<64x4xf32> -> vector<64x4xf32>
    %c0_31 = arith.constant 0 : index
    %c0_32 = arith.constant 0 : index
    %33 = vector.load %arg13[%c0_31, %c0_32] : memref<64x1xf32, #tpu.memory_space<vmem>>, vector<64x1xf32>
    %34 = vector.broadcast %33 : vector<64x1xf32> to vector<64x4xf32>
    %35 = arith.addf %32, %34 : vector<64x4xf32>
    %c0_33 = arith.constant 0 : index
    %c0_34 = arith.constant 0 : index
    %36 = vector.load %arg18[%c0_33, %c0_34] : memref<64x4xf32, #tpu.memory_space<vmem>>, vector<64x4xf32>
    tpu.vector_store %arg18[%c0_33, %c0_34], %35 {strides = array<i32>} : memref<64x4xf32, #tpu.memory_space<vmem>>, vector<64x4xf32>,
    %c0_35 = arith.constant 0 : index
    %c0_36 = arith.constant 0 : index
    %37 = vector.load %arg14[%c0_35, %c0_36] : memref<16x128xf32, #tpu.memory_space<vmem>>, vector<16x128xf32>
    %cst_37 = arith.constant dense<0.000000e+00> : vector<16x4xf32>
    %38 = tpu.matmul %37, %2, %cst_37 {dimension_numbers = #tpu.dot_dimension_numbers<[1], [0], [0], [1], [0, 0, 1, 1], [], []>} : vector<16x128xf32>, vector<128x4xf32>, vector<16x4xf32> -> vector<16x4xf32>
    %c0_38 = arith.constant 0 : index
    %c0_39 = arith.constant 0 : index
    %39 = vector.load %arg15[%c0_38, %c0_39] : memref<4x5xf32, #tpu.memory_space<vmem>>, vector<4x5xf32>
    %cst_40 = arith.constant dense<0.000000e+00> : vector<16x5xf32>
    %40 = tpu.matmul %38, %39, %cst_40 {dimension_numbers = #tpu.dot_dimension_numbers<[1], [0], [0], [1], [0, 0, 1, 1], [], []>} : vector<16x4xf32>, vector<4x5xf32>, vector<16x5xf32> -> vector<16x5xf32>
    %c0_41 = arith.constant 0 : index
    %c0_42 = arith.constant 0 : index
    %41 = vector.load %arg16[%c0_41, %c0_42] : memref<1x5xf32, #tpu.memory_space<vmem>>, vector<1x5xf32>
    %42 = vector.broadcast %41 : vector<1x5xf32> to vector<16x5xf32>
    %43 = arith.addf %40, %42 : vector<16x5xf32>
    %cst_43 = arith.constant dense<0xFF800000> : vector<16xf32>
    %44 = vector.multi_reduction <maximumf>, %43, %cst_43 [1] : vector<16x5xf32> to vector<16xf32>
    %45 = vector.shape_cast %44 : vector<16xf32> to vector<16x1xf32>
    %46 = vector.broadcast %45 : vector<16x1xf32> to vector<16x5xf32>
    %47 = arith.subf %43, %46 : vector<16x5xf32>
    %48 = math.exp %47 : vector<16x5xf32>
    %cst_44 = arith.constant dense<0.000000e+00> : vector<16xf32>
    %49 = vector.multi_reduction <add>, %48, %cst_44 [1] : vector<16x5xf32> to vector<16xf32>
    %50 = vector.shape_cast %49 : vector<16xf32> to vector<16x1xf32>
    %51 = vector.broadcast %50 : vector<16x1xf32> to vector<16x5xf32>
    %52 = arith.divf %48, %51 : vector<16x5xf32>
    %c0_45 = arith.constant 0 : index
    %c0_46 = arith.constant 0 : index
    %53 = vector.load %arg19[%c0_45, %c0_46] : memref<16x5xf32, #tpu.memory_space<vmem>>, vector<16x5xf32>
    tpu.vector_store %arg19[%c0_45, %c0_46], %52 {strides = array<i32>} : memref<16x5xf32, #tpu.memory_space<vmem>>, vector<16x5xf32>,
    %c0_47 = arith.constant 0 : index
    %c0_48 = arith.constant 0 : index
    %54 = vector.load %arg17[%c0_47, %c0_48] : memref<128x4xf32, #tpu.memory_space<vmem>>, vector<128x4xf32>
    %55 = arith.subf %54, %3 : vector<128x4xf32>
    %56 = arith.mulf %55, %55 : vector<128x4xf32>
    %57 = vector.shape_cast %56 : vector<128x4xf32> to vector<1x128x4xf32>
    %cst_49 = arith.constant dense<0.000000e+00> : vector<1xf32>
    %58 = vector.multi_reduction <add>, %57, %cst_49 [1, 2] : vector<1x128x4xf32> to vector<1xf32>
    %59 = vector.shape_cast %58 : vector<1xf32> to vector<1x1x1xf32>
    %60 = vector.extract %59[0, 0, 0] : f32 from vector<1x1x1xf32>
    %61 = vector.broadcast %60 : f32 to vector<1x1xf32>
    %c0_50 = arith.constant 0 : index
    %c0_51 = arith.constant 0 : index
    %62 = vector.load %arg20[%c0_50, %c0_51] : memref<1x1xf32, #tpu.memory_space<vmem>>, vector<1x1xf32>
    tpu.vector_store %arg20[%c0_50, %c0_51], %61 {strides = array<i32>} : memref<1x1xf32, #tpu.memory_space<vmem>>, vector<1x1xf32>,
    return
  }
  func.func @transform_0(%arg0: i32) -> (i32, i32) {
    %c0_i32 = arith.constant 0 : i32
    %c0_i32_0 = arith.constant 0 : i32
    %c0_i32_1 = arith.constant 0 : i32
    return %c0_i32, %c0_i32_0 : i32, i32
  }
  func.func @transform_1(%arg0: i32) -> (i32, i32) {
    %c0_i32 = arith.constant 0 : i32
    %c0_i32_0 = arith.constant 0 : i32
    %c0_i32_1 = arith.constant 0 : i32
    return %c0_i32, %c0_i32_0 : i32, i32
  }
  func.func @transform_2(%arg0: i32) -> (i32, i32) {
    %c0_i32 = arith.constant 0 : i32
    %c0_i32_0 = arith.constant 0 : i32
    %c0_i32_1 = arith.constant 0 : i32
    return %c0_i32, %c0_i32_0 : i32, i32
  }
  func.func @transform_3(%arg0: i32) -> (i32, i32) {
    %c0_i32 = arith.constant 0 : i32
    %c0_i32_0 = arith.constant 0 : i32
    %c0_i32_1 = arith.constant 0 : i32
    return %c0_i32, %c0_i32_0 : i32, i32
  }
  func.func @transform_4(%arg0: i32) -> (i32, i32) {
    %c0_i32 = arith.constant 0 : i32
    %c0_i32_0 = arith.constant 0 : i32
    %c0_i32_1 = arith.constant 0 : i32
    return %c0_i32, %c0_i32_0 : i32, i32
  }
  func.func @transform_5(%arg0: i32) -> (i32, i32) {
    %c0_i32 = arith.constant 0 : i32
    %c0_i32_0 = arith.constant 0 : i32
    %c0_i32_1 = arith.constant 0 : i32
    return %c0_i32, %c0_i32_0 : i32, i32
  }
  func.func @transform_6(%arg0: i32) -> (i32, i32) {
    %c0_i32 = arith.constant 0 : i32
    %c0_i32_0 = arith.constant 0 : i32
    %c0_i32_1 = arith.constant 0 : i32
    return %c0_i32, %c0_i32_0 : i32, i32
  }
  func.func @transform_7(%arg0: i32) -> (i32, i32) {
    %c0_i32 = arith.constant 0 : i32
    %c0_i32_0 = arith.constant 0 : i32
    %c0_i32_1 = arith.constant 0 : i32
    return %c0_i32, %c0_i32_0 : i32, i32
  }
  func.func @transform_8(%arg0: i32) -> (i32, i32) {
    %c0_i32 = arith.constant 0 : i32
    %c0_i32_0 = arith.constant 0 : i32
    %c0_i32_1 = arith.constant 0 : i32
    return %c0_i32, %c0_i32_0 : i32, i32
  }
  func.func @transform_9(%arg0: i32) -> (i32, i32) {
    %c0_i32 = arith.constant 0 : i32
    %c0_i32_0 = arith.constant 0 : i32
    %c0_i32_1 = arith.constant 0 : i32
    return %c0_i32, %c0_i32_0 : i32, i32
  }
  func.func @transform_10(%arg0: i32) -> (i32, i32) {
    %c0_i32 = arith.constant 0 : i32
    %c0_i32_0 = arith.constant 0 : i32
    %c0_i32_1 = arith.constant 0 : i32
    return %c0_i32, %c0_i32_0 : i32, i32
  }
  func.func @transform_11(%arg0: i32) -> (i32, i32) {
    %c0_i32 = arith.constant 0 : i32
    %c0_i32_0 = arith.constant 0 : i32
    %c0_i32_1 = arith.constant 0 : i32
    return %c0_i32, %c0_i32_0 : i32, i32
  }
  func.func @transform_12(%arg0: i32) -> (i32, i32) {
    %c0_i32 = arith.constant 0 : i32
    %c0_i32_0 = arith.constant 0 : i32
    %c0_i32_1 = arith.constant 0 : i32
    return %c0_i32, %c0_i32_0 : i32, i32
  }
  func.func @transform_13(%arg0: i32) -> (i32, i32) {
    %c0_i32 = arith.constant 0 : i32
    %c0_i32_0 = arith.constant 0 : i32
    %c0_i32_1 = arith.constant 0 : i32
    return %c0_i32, %c0_i32_0 : i32, i32
  }
  func.func @transform_14(%arg0: i32) -> (i32, i32) {
    %c0_i32 = arith.constant 0 : i32
    %c0_i32_0 = arith.constant 0 : i32
    %c0_i32_1 = arith.constant 0 : i32
    return %c0_i32, %c0_i32_0 : i32, i32
  }
  func.func @transform_15(%arg0: i32) -> (i32, i32) {
    %c0_i32 = arith.constant 0 : i32
    %c0_i32_0 = arith.constant 0 : i32
    %c0_i32_1 = arith.constant 0 : i32
    return %c0_i32, %c0_i32_0 : i32, i32
  }
  func.func @transform_16(%arg0: i32) -> (i32, i32) {
    %c0_i32 = arith.constant 0 : i32
    %c0_i32_0 = arith.constant 0 : i32
    %c0_i32_1 = arith.constant 0 : i32
    return %c0_i32, %c0_i32_0 : i32, i32
  }
  func.func @transform_17(%arg0: i32) -> (i32, i32) {
    %c0_i32 = arith.constant 0 : i32
    %c0_i32_0 = arith.constant 0 : i32
    %c0_i32_1 = arith.constant 0 : i32
    return %c0_i32, %c0_i32_0 : i32, i32
  }
  func.func @transform_18(%arg0: i32) -> (i32, i32) {
    %c0_i32 = arith.constant 0 : i32
    %c0_i32_0 = arith.constant 0 : i32
    %c0_i32_1 = arith.constant 0 : i32
    return %c0_i32, %c0_i32_0 : i32, i32
  }
  func.func @transform_19(%arg0: i32) -> (i32, i32) {
    %c0_i32 = arith.constant 0 : i32
    %c0_i32_0 = arith.constant 0 : i32
    %c0_i32_1 = arith.constant 0 : i32
    return %c0_i32, %c0_i32_0 : i32, i32
  }
}

</mosaic_0001>

<llo_original>
// kernel: model_forward.1
$region0: #{model_forward.1}
  #allocation0 [shape = 'u32[]', space=smem, size = 0x4, offset = 0x4, fixed_abs, tag = 'smem constant byte address 0x4 - core index']
  #allocation1 [shape = 'u32[72,128]{1,0:T(1,128)}', space=vmem, size = 0x9000, scoped, tag = 'internal scratch']
  %s0 = inlined_call_operand.vmem [shape: f32[128,4], index: 0, kind: input, shape index: {}]
  %s1 = inlined_call_operand.vmem [shape: f32[128,128], index: 1, kind: input, shape index: {}]
  %s2 = inlined_call_operand.vmem [shape: f32[4,32], index: 2, kind: input, shape index: {}]
  %s3 = inlined_call_operand.vmem [shape: f32[4,32], index: 3, kind: input, shape index: {}]
  %s4 = inlined_call_operand.vmem [shape: f32[1,32], index: 4, kind: input, shape index: {}]
  %s5 = inlined_call_operand.vmem [shape: f32[32,96], index: 5, kind: input, shape index: {}]
  %s6 = inlined_call_operand.vmem [shape: f32[1,96], index: 6, kind: input, shape index: {}]
  %s7 = inlined_call_operand.vmem [shape: f32[96,64], index: 7, kind: input, shape index: {}]
  %s8 = inlined_call_operand.vmem [shape: f32[1,64], index: 8, kind: input, shape index: {}]
  %s9 = inlined_call_operand.vmem [shape: f32[64,4], index: 9, kind: input, shape index: {}]
  %s10 = inlined_call_operand.vmem [shape: f32[1,4], index: 10, kind: input, shape index: {}]
  %s11 = inlined_call_operand.vmem [shape: f32[64,128], index: 11, kind: input, shape index: {}]
  %s12 = inlined_call_operand.vmem [shape: f32[64,1], index: 12, kind: input, shape index: {}]
  %s13 = inlined_call_operand.vmem [shape: f32[16,128], index: 13, kind: input, shape index: {}]
  %s14 = inlined_call_operand.vmem [shape: f32[4,5], index: 14, kind: input, shape index: {}]
  %s15 = inlined_call_operand.vmem [shape: f32[1,5], index: 15, kind: input, shape index: {}]
  %s16 = inlined_call_operand.vmem [shape: f32[128,4], index: 16, kind: input, shape index: {}]
  %s17 = inlined_call_operand.vmem [shape: f32[64,4], index: 17, kind: output, shape index: {0}]
  %s18 = inlined_call_operand.vmem [shape: f32[16,5], index: 18, kind: output, shape index: {1}]
  %s19 = inlined_call_operand.hbm [shape: f32[1,1], index: 19, kind: output, shape index: {2}]
  %20 = xla_tuple %s17, %s18, %s19
  %s21 = sld [smem:[#allocation0]]
  $region94: #{model_forward.1} parent=0
    _
  %s23 = ssub.s32 1, %s21
  %s24 = scalar_select 0, %s23, %s21
  $region1: #{model_forward.1} parent=0
    #allocation2 [shape = 'u8[512]{0}', space=vmem, size = 0x400, scoped, tag = 'output window, operand 2, single buffered']
    #allocation3 [shape = 's32[1]{0}', space=sflag, size = 0x4, scoped, tag = 'scoped memory for model_forward.1']
    %25 = vsyncpa [#allocation3], 0
    // Predicated region
    $region2: #{model_forward.1} parent=1 // pred_check
      _
    $region3: #{model_forward.1} parent=1 // pred_check_branch
      %27 = sbr.rel (0) target = $region5
    $region4: #{model_forward.1} parent=1 // pred_region
      _
    $region5: #{model_forward.1} parent=1 // pred_fallthru
      _
    // Predicated region
    $region6: #{model_forward.1} parent=1 // pred_check
      _
    $region7: #{model_forward.1} parent=1 // pred_check_branch
      %29 = sbr.rel (0) target = $region9
    $region8: #{model_forward.1} parent=1 // pred_region
      _
    $region9: #{model_forward.1} parent=1 // pred_fallthru
      _
    // Predicated region
    $region10: #{model_forward.1} parent=1 // pred_check
      _
    $region11: #{model_forward.1} parent=1 // pred_check_branch
      %31 = sbr.rel (0) target = $region13
    $region12: #{model_forward.1} parent=1 // pred_region
      _
    $region13: #{model_forward.1} parent=1 // pred_fallthru
      _
    // Predicated region
    $region14: #{model_forward.1} parent=1 // pred_check
      _
    $region15: #{model_forward.1} parent=1 // pred_check_branch
      %33 = sbr.rel (0) target = $region17
    $region16: #{model_forward.1} parent=1 // pred_region
      _
    $region17: #{model_forward.1} parent=1 // pred_fallthru
      _
    // Predicated region
    $region18: #{model_forward.1} parent=1 // pred_check
      _
    $region19: #{model_forward.1} parent=1 // pred_check_branch
      %35 = sbr.rel (0) target = $region21
    $region20: #{model_forward.1} parent=1 // pred_region
      _
    $region21: #{model_forward.1} parent=1 // pred_fallthru
      _
    // Predicated region
    $region22: #{model_forward.1} parent=1 // pred_check
      _
    $region23: #{model_forward.1} parent=1 // pred_check_branch
      %37 = sbr.rel (0) target = $region25
    $region24: #{model_forward.1} parent=1 // pred_region
      _
    $region25: #{model_forward.1} parent=1 // pred_fallthru
      _
    // Predicated region
    $region26: #{model_forward.1} parent=1 // pred_check
      _
    $region27: #{model_forward.1} parent=1 // pred_check_branch
      %39 = sbr.rel (0) target = $region29
    $region28: #{model_forward.1} parent=1 // pred_region
      _
    $region29: #{model_forward.1} parent=1 // pred_fallthru
      _
    // Predicated region
    $region30: #{model_forward.1} parent=1 // pred_check
      _
    $region31: #{model_forward.1} parent=1 // pred_check_branch
      %41 = sbr.rel (0) target = $region33
    $region32: #{model_forward.1} parent=1 // pred_region
      _
    $region33: #{model_forward.1} parent=1 // pred_fallthru
      _
    // Predicated region
    $region34: #{model_forward.1} parent=1 // pred_check
      _
    $region35: #{model_forward.1} parent=1 // pred_check_branch
      %43 = sbr.rel (0) target = $region37
    $region36: #{model_forward.1} parent=1 // pred_region
      _
    $region37: #{model_forward.1} parent=1 // pred_fallthru
      _
    // Predicated region
    $region38: #{model_forward.1} parent=1 // pred_check
      _
    $region39: #{model_forward.1} parent=1 // pred_check_branch
      %45 = sbr.rel (0) target = $region41
    $region40: #{model_forward.1} parent=1 // pred_region
      _
    $region41: #{model_forward.1} parent=1 // pred_fallthru
      _
    // Predicated region
    $region42: #{model_forward.1} parent=1 // pred_check
      _
    $region43: #{model_forward.1} parent=1 // pred_check_branch
      %47 = sbr.rel (0) target = $region45
    $region44: #{model_forward.1} parent=1 // pred_region
      _
    $region45: #{model_forward.1} parent=1 // pred_fallthru
      _
    // Predicated region
    $region46: #{model_forward.1} parent=1 // pred_check
      _
    $region47: #{model_forward.1} parent=1 // pred_check_branch
      %49 = sbr.rel (0) target = $region49
    $region48: #{model_forward.1} parent=1 // pred_region
      _
    $region49: #{model_forward.1} parent=1 // pred_fallthru
      _
    // Predicated region
    $region50: #{model_forward.1} parent=1 // pred_check
      _
    $region51: #{model_forward.1} parent=1 // pred_check_branch
      %51 = sbr.rel (0) target = $region53
    $region52: #{model_forward.1} parent=1 // pred_region
      _
    $region53: #{model_forward.1} parent=1 // pred_fallthru
      _
    // Predicated region
    $region54: #{model_forward.1} parent=1 // pred_check
      _
    $region55: #{model_forward.1} parent=1 // pred_check_branch
      %53 = sbr.rel (0) target = $region57
    $region56: #{model_forward.1} parent=1 // pred_region
      _
    $region57: #{model_forward.1} parent=1 // pred_fallthru
      _
    // Predicated region
    $region58: #{model_forward.1} parent=1 // pred_check
      _
    $region59: #{model_forward.1} parent=1 // pred_check_branch
      %55 = sbr.rel (0) target = $region61
    $region60: #{model_forward.1} parent=1 // pred_region
      _
    $region61: #{model_forward.1} parent=1 // pred_fallthru
      _
    // Predicated region
    $region62: #{model_forward.1} parent=1 // pred_check
      _
    $region63: #{model_forward.1} parent=1 // pred_check_branch
      %57 = sbr.rel (0) target = $region65
    $region64: #{model_forward.1} parent=1 // pred_region
      _
    $region65: #{model_forward.1} parent=1 // pred_fallthru
      _
    // Predicated region
    $region66: #{model_forward.1} parent=1 // pred_check
      _
    $region67: #{model_forward.1} parent=1 // pred_check_branch
      %59 = sbr.rel (0) target = $region69
    $region68: #{model_forward.1} parent=1 // pred_region
      _
    $region69: #{model_forward.1} parent=1 // pred_fallthru
      _
    %v60 = vld [vmem:[%s0] sm:$0xff]
    %v61 = vld [vmem:[%s0 + $0x8] sm:$0xff]
    %v62 = vld [vmem:[%s0 + $0x10] sm:$0xff]
    %v63 = vld [vmem:[%s0 + $0x18] sm:$0xff]
    %v64 = vld [vmem:[%s0 + $0x20] sm:$0xff]
    %v65 = vld [vmem:[%s0 + $0x28] sm:$0xff]
    %v66 = vld [vmem:[%s0 + $0x30] sm:$0xff]
    %v67 = vld [vmem:[%s0 + $0x38] sm:$0xff]
    %v68 = vld [vmem:[%s0 + $0x40] sm:$0xff]
    %v69 = vld [vmem:[%s0 + $0x48] sm:$0xff]
    %v70 = vld [vmem:[%s0 + $0x50] sm:$0xff]
    %v71 = vld [vmem:[%s0 + $0x58] sm:$0xff]
    %v72 = vld [vmem:[%s0 + $0x60] sm:$0xff]
    %v73 = vld [vmem:[%s0 + $0x68] sm:$0xff]
    %v74 = vld [vmem:[%s0 + $0x70] sm:$0xff]
    %v75 = vld [vmem:[%s0 + $0x78] sm:$0xff]
    %v76 = vld [vmem:[%s1] sm:$0xff]
    %v77 = vld [vmem:[%s1 + $0x8] sm:$0xff]
    %v78 = vld [vmem:[%s1 + $0x10] sm:$0xff]
    %v79 = vld [vmem:[%s1 + $0x18] sm:$0xff]
    %v80 = vld [vmem:[%s1 + $0x20] sm:$0xff]
    %v81 = vld [vmem:[%s1 + $0x28] sm:$0xff]
    %v82 = vld [vmem:[%s1 + $0x30] sm:$0xff]
    %v83 = vld [vmem:[%s1 + $0x38] sm:$0xff]
    %v84 = vld [vmem:[%s1 + $0x40] sm:$0xff]
    %v85 = vld [vmem:[%s1 + $0x48] sm:$0xff]
    %v86 = vld [vmem:[%s1 + $0x50] sm:$0xff]
    %v87 = vld [vmem:[%s1 + $0x58] sm:$0xff]
    %v88 = vld [vmem:[%s1 + $0x60] sm:$0xff]
    %v89 = vld [vmem:[%s1 + $0x68] sm:$0xff]
    %v90 = vld [vmem:[%s1 + $0x70] sm:$0xff]
    %v91 = vld [vmem:[%s1 + $0x78] sm:$0xff]
    %92 = vmatpush.msra.mxu0 %v75
    %93 = vmatpush.msra.mxu0 %v74
    %94 = vmatpush.msra.mxu0 %v73
    %95 = vmatpush.msra.mxu0 %v72
    %96 = vmatpush.msra.mxu0 %v71
    %97 = vmatpush.msra.mxu0 %v70
    %98 = vmatpush.msra.mxu0 %v69
    %99 = vmatpush.msra.mxu0 %v68
    %100 = vmatpush.msra.mxu0 %v67
    %101 = vmatpush.msra.mxu0 %v66
    %102 = vmatpush.msra.mxu0 %v65
    %103 = vmatpush.msra.mxu0 %v64
    %104 = vmatpush.msra.mxu0 %v63
    %105 = vmatpush.msra.mxu0 %v62
    %106 = vmatpush.msra.mxu0 %v61
    %107 = vmatpush.msra.mxu0 %v60
    %108 = vmatmul.f32.gmra.mxu0 %v76
    %v109 = vpop.f32.mrf.mxu0
    %v110 = vadd.f32 0.0, %v109
    %111 = vmatmul.f32.gmra.mxu0 %v77
    %v112 = vpop.f32.mrf.mxu0
    %v113 = vadd.f32 0.0, %v112
    %114 = vmatmul.f32.gmra.mxu0 %v78
    %v115 = vpop.f32.mrf.mxu0
    %v116 = vadd.f32 0.0, %v115
    %117 = vmatmul.f32.gmra.mxu0 %v79
    %v118 = vpop.f32.mrf.mxu0
    %v119 = vadd.f32 0.0, %v118
    %120 = vmatmul.f32.gmra.mxu0 %v80
    %v121 = vpop.f32.mrf.mxu0
    %v122 = vadd.f32 0.0, %v121
    %123 = vmatmul.f32.gmra.mxu0 %v81
    %v124 = vpop.f32.mrf.mxu0
    %v125 = vadd.f32 0.0, %v124
    %126 = vmatmul.f32.gmra.mxu0 %v82
    %v127 = vpop.f32.mrf.mxu0
    %v128 = vadd.f32 0.0, %v127
    %129 = vmatmul.f32.gmra.mxu0 %v83
    %v130 = vpop.f32.mrf.mxu0
    %v131 = vadd.f32 0.0, %v130
    %132 = vmatmul.f32.gmra.mxu0 %v84
    %v133 = vpop.f32.mrf.mxu0
    %v134 = vadd.f32 0.0, %v133
    %135 = vmatmul.f32.gmra.mxu0 %v85
    %v136 = vpop.f32.mrf.mxu0
    %v137 = vadd.f32 0.0, %v136
    %138 = vmatmul.f32.gmra.mxu0 %v86
    %v139 = vpop.f32.mrf.mxu0
    %v140 = vadd.f32 0.0, %v139
    %141 = vmatmul.f32.gmra.mxu0 %v87
    %v142 = vpop.f32.mrf.mxu0
    %v143 = vadd.f32 0.0, %v142
    %144 = vmatmul.f32.gmra.mxu0 %v88
    %v145 = vpop.f32.mrf.mxu0
    %v146 = vadd.f32 0.0, %v145
    %147 = vmatmul.f32.gmra.mxu0 %v89
    %v148 = vpop.f32.mrf.mxu0
    %v149 = vadd.f32 0.0, %v148
    %150 = vmatmul.f32.gmra.mxu0 %v90
    %v151 = vpop.f32.mrf.mxu0
    %v152 = vadd.f32 0.0, %v151
    %153 = vmatmul.f32.gmra.mxu0 %v91
    %v154 = vpop.f32.mrf.mxu0
    %v155 = vadd.f32 0.0, %v154
    %156 = vdwg.mxu0
    %v157 = vsub.f32 %v60, %v110
    %v158 = vsub.f32 %v61, %v113
    %v159 = vsub.f32 %v62, %v116
    %v160 = vsub.f32 %v63, %v119
    %v161 = vsub.f32 %v64, %v122
    %v162 = vsub.f32 %v65, %v125
    %v163 = vsub.f32 %v66, %v128
    %v164 = vsub.f32 %v67, %v131
    %v165 = vsub.f32 %v68, %v134
    %v166 = vsub.f32 %v69, %v137
    %v167 = vsub.f32 %v70, %v140
    %v168 = vsub.f32 %v71, %v143
    %v169 = vsub.f32 %v72, %v146
    %v170 = vsub.f32 %v73, %v149
    %v171 = vsub.f32 %v74, %v152
    %v172 = vsub.f32 %v75, %v155
    %v173 = vld [vmem:[%s2] sm:$0xf]
    %v174 = vld [vmem:[%s3] sm:$0xf]
    %vm175 = vcmask 31744
    %v177 = vsel %vm175, %v157, 0
    %v180 = vsel %vm175, %v158, 0
    %v183 = vsel %vm175, %v159, 0
    %v186 = vsel %vm175, %v160, 0
    %v189 = vsel %vm175, %v161, 0
    %v192 = vsel %vm175, %v162, 0
    %v195 = vsel %vm175, %v163, 0
    %v198 = vsel %vm175, %v164, 0
    %v201 = vsel %vm175, %v165, 0
    %v204 = vsel %vm175, %v166, 0
    %v207 = vsel %vm175, %v167, 0
    %v210 = vsel %vm175, %v168, 0
    %v213 = vsel %vm175, %v169, 0
    %v216 = vsel %vm175, %v170, 0
    %v219 = vsel %vm175, %v171, 0
    %v222 = vsel %vm175, %v172, 0
    %vm224 = vcmask 1043456
    %v226 = vsel %vm224, %v174, 0
    %228 = vmatpush.msra.mxu0 0.0
    %229 = vmatpush.msra.mxu0 0.0
    %230 = vmatpush.msra.mxu0 0.0
    %231 = vmatpush.msra.mxu0 0.0
    %232 = vmatpush.msra.mxu0 0.0
    %233 = vmatpush.msra.mxu0 0.0
    %234 = vmatpush.msra.mxu0 0.0
    %235 = vmatpush.msra.mxu0 0.0
    %236 = vmatpush.msra.mxu0 0.0
    %237 = vmatpush.msra.mxu0 0.0
    %238 = vmatpush.msra.mxu0 0.0
    %239 = vmatpush.msra.mxu0 0.0
    %240 = vmatpush.msra.mxu0 0.0
    %241 = vmatpush.msra.mxu0 0.0
    %242 = vmatpush.msra.mxu0 0.0
    %243 = vmatpush.msra.mxu0 %v226
    %244 = vmatmul.f32.gmra.mxu0 %v177
    %v245 = vpop.f32.mrf.mxu0
    %v246 = vadd.f32 0.0, %v245
    %247 = vmatmul.f32.gmra.mxu0 %v180
    %v248 = vpop.f32.mrf.mxu0
    %v249 = vadd.f32 0.0, %v248
    %250 = vmatmul.f32.gmra.mxu0 %v183
    %v251 = vpop.f32.mrf.mxu0
    %v252 = vadd.f32 0.0, %v251
    %253 = vmatmul.f32.gmra.mxu0 %v186
    %v254 = vpop.f32.mrf.mxu0
    %v255 = vadd.f32 0.0, %v254
    %256 = vmatmul.f32.gmra.mxu0 %v189
    %v257 = vpop.f32.mrf.mxu0
    %v258 = vadd.f32 0.0, %v257
    %259 = vmatmul.f32.gmra.mxu0 %v192
    %v260 = vpop.f32.mrf.mxu0
    %v261 = vadd.f32 0.0, %v260
    %262 = vmatmul.f32.gmra.mxu0 %v195
    %v263 = vpop.f32.mrf.mxu0
    %v264 = vadd.f32 0.0, %v263
    %265 = vmatmul.f32.gmra.mxu0 %v198
    %v266 = vpop.f32.mrf.mxu0
    %v267 = vadd.f32 0.0, %v266
    %268 = vmatmul.f32.gmra.mxu0 %v201
    %v269 = vpop.f32.mrf.mxu0
    %v270 = vadd.f32 0.0, %v269
    %271 = vmatmul.f32.gmra.mxu0 %v204
    %v272 = vpop.f32.mrf.mxu0
    %v273 = vadd.f32 0.0, %v272
    %274 = vmatmul.f32.gmra.mxu0 %v207
    %v275 = vpop.f32.mrf.mxu0
    %v276 = vadd.f32 0.0, %v275
    %277 = vmatmul.f32.gmra.mxu0 %v210
    %v278 = vpop.f32.mrf.mxu0
    %v279 = vadd.f32 0.0, %v278
    %280 = vmatmul.f32.gmra.mxu0 %v213
    %v281 = vpop.f32.mrf.mxu0
    %v282 = vadd.f32 0.0, %v281
    %283 = vmatmul.f32.gmra.mxu0 %v216
    %v284 = vpop.f32.mrf.mxu0
    %v285 = vadd.f32 0.0, %v284
    %286 = vmatmul.f32.gmra.mxu0 %v219
    %v287 = vpop.f32.mrf.mxu0
    %v288 = vadd.f32 0.0, %v287
    %289 = vmatmul.f32.gmra.mxu0 %v222
    %v290 = vpop.f32.mrf.mxu0
    %v291 = vadd.f32 0.0, %v290
    %292 = vdwg.mxu0
    %v294 = vsel %vm175, %v110, 0
    %v297 = vsel %vm175, %v113, 0
    %v300 = vsel %vm175, %v116, 0
    %v303 = vsel %vm175, %v119, 0
    %v306 = vsel %vm175, %v122, 0
    %v309 = vsel %vm175, %v125, 0
    %v312 = vsel %vm175, %v128, 0
    %v315 = vsel %vm175, %v131, 0
    %v318 = vsel %vm175, %v134, 0
    %v321 = vsel %vm175, %v137, 0
    %v324 = vsel %vm175, %v140, 0
    %v327 = vsel %vm175, %v143, 0
    %v330 = vsel %vm175, %v146, 0
    %v333 = vsel %vm175, %v149, 0
    %v336 = vsel %vm175, %v152, 0
    %v339 = vsel %vm175, %v155, 0
    %v342 = vsel %vm224, %v173, 0
    %344 = vmatpush.msra.mxu0 0.0
    %345 = vmatpush.msra.mxu0 0.0
    %346 = vmatpush.msra.mxu0 0.0
    %347 = vmatpush.msra.mxu0 0.0
    %348 = vmatpush.msra.mxu0 0.0
    %349 = vmatpush.msra.mxu0 0.0
    %350 = vmatpush.msra.mxu0 0.0
    %351 = vmatpush.msra.mxu0 0.0
    %352 = vmatpush.msra.mxu0 0.0
    %353 = vmatpush.msra.mxu0 0.0
    %354 = vmatpush.msra.mxu0 0.0
    %355 = vmatpush.msra.mxu0 0.0
    %356 = vmatpush.msra.mxu0 0.0
    %357 = vmatpush.msra.mxu0 0.0
    %358 = vmatpush.msra.mxu0 0.0
    %359 = vmatpush.msra.mxu0 %v342
    %360 = vmatmul.f32.gmra.mxu0 %v294
    %v361 = vpop.f32.mrf.mxu0
    %v362 = vadd.f32 %v246, %v361
    %363 = vmatmul.f32.gmra.mxu0 %v297
    %v364 = vpop.f32.mrf.mxu0
    %v365 = vadd.f32 %v249, %v364
    %366 = vmatmul.f32.gmra.mxu0 %v300
    %v367 = vpop.f32.mrf.mxu0
    %v368 = vadd.f32 %v252, %v367
    %369 = vmatmul.f32.gmra.mxu0 %v303
    %v370 = vpop.f32.mrf.mxu0
    %v371 = vadd.f32 %v255, %v370
    %372 = vmatmul.f32.gmra.mxu0 %v306
    %v373 = vpop.f32.mrf.mxu0
    %v374 = vadd.f32 %v258, %v373
    %375 = vmatmul.f32.gmra.mxu0 %v309
    %v376 = vpop.f32.mrf.mxu0
    %v377 = vadd.f32 %v261, %v376
    %378 = vmatmul.f32.gmra.mxu0 %v312
    %v379 = vpop.f32.mrf.mxu0
    %v380 = vadd.f32 %v264, %v379
    %381 = vmatmul.f32.gmra.mxu0 %v315
    %v382 = vpop.f32.mrf.mxu0
    %v383 = vadd.f32 %v267, %v382
    %384 = vmatmul.f32.gmra.mxu0 %v318
    %v385 = vpop.f32.mrf.mxu0
    %v386 = vadd.f32 %v270, %v385
    %387 = vmatmul.f32.gmra.mxu0 %v321
    %v388 = vpop.f32.mrf.mxu0
    %v389 = vadd.f32 %v273, %v388
    %390 = vmatmul.f32.gmra.mxu0 %v324
    %v391 = vpop.f32.mrf.mxu0
    %v392 = vadd.f32 %v276, %v391
    %393 = vmatmul.f32.gmra.mxu0 %v327
    %v394 = vpop.f32.mrf.mxu0
    %v395 = vadd.f32 %v279, %v394
    %396 = vmatmul.f32.gmra.mxu0 %v330
    %v397 = vpop.f32.mrf.mxu0
    %v398 = vadd.f32 %v282, %v397
    %399 = vmatmul.f32.gmra.mxu0 %v333
    %v400 = vpop.f32.mrf.mxu0
    %v401 = vadd.f32 %v285, %v400
    %402 = vmatmul.f32.gmra.mxu0 %v336
    %v403 = vpop.f32.mrf.mxu0
    %v404 = vadd.f32 %v288, %v403
    %405 = vmatmul.f32.gmra.mxu0 %v339
    %v406 = vpop.f32.mrf.mxu0
    %v407 = vadd.f32 %v291, %v406
    %408 = vdwg.mxu0
    %v409 = vld [vmem:[%s4] sm:$0x1]
    %v411 = vperm.slane %v409, 0
    %v413 = vadd.f32 %v362, %v411
    %v414 = vadd.f32 %v365, %v411
    %v415 = vadd.f32 %v368, %v411
    %v416 = vadd.f32 %v371, %v411
    %v417 = vadd.f32 %v374, %v411
    %v418 = vadd.f32 %v377, %v411
    %v419 = vadd.f32 %v380, %v411
    %v420 = vadd.f32 %v383, %v411
    %v421 = vadd.f32 %v386, %v411
    %v422 = vadd.f32 %v389, %v411
    %v423 = vadd.f32 %v392, %v411
    %v424 = vadd.f32 %v395, %v411
    %v425 = vadd.f32 %v398, %v411
    %v426 = vadd.f32 %v401, %v411
    %v427 = vadd.f32 %v404, %v411
    %v428 = vadd.f32 %v407, %v411
    %v429 = vld [vmem:[%s5] sm:$0xff]
    %v430 = vld [vmem:[%s5 + $0x8] sm:$0xff]
    %v431 = vld [vmem:[%s5 + $0x10] sm:$0xff]
    %v432 = vld [vmem:[%s5 + $0x18] sm:$0xff]
    %v433 = vld [vmem:[%s6] sm:$0x1]
    %v435 = vperm.slane %v433, 0
    %vm437 = vcmask 261120
    %v439 = vsel %vm437, %v413, 0
    %v442 = vsel %vm437, %v414, 0
    %v445 = vsel %vm437, %v415, 0
    %v448 = vsel %vm437, %v416, 0
    %v451 = vsel %vm437, %v417, 0
    %v454 = vsel %vm437, %v418, 0
    %v457 = vsel %vm437, %v419, 0
    %v460 = vsel %vm437, %v420, 0
    %v463 = vsel %vm437, %v421, 0
    %v466 = vsel %vm437, %v422, 0
    %v469 = vsel %vm437, %v423, 0
    %v472 = vsel %vm437, %v424, 0
    %v475 = vsel %vm437, %v425, 0
    %v478 = vsel %vm437, %v426, 0
    %v481 = vsel %vm437, %v427, 0
    %v484 = vsel %vm437, %v428, 0
    %486 = vmatpush.msra.mxu0 0.0
    %487 = vmatpush.msra.mxu0 0.0
    %488 = vmatpush.msra.mxu0 0.0
    %489 = vmatpush.msra.mxu0 0.0
    %490 = vmatpush.msra.mxu0 0.0
    %491 = vmatpush.msra.mxu0 0.0
    %492 = vmatpush.msra.mxu0 0.0
    %493 = vmatpush.msra.mxu0 0.0
    %494 = vmatpush.msra.mxu0 0.0
    %495 = vmatpush.msra.mxu0 0.0
    %496 = vmatpush.msra.mxu0 0.0
    %497 = vmatpush.msra.mxu0 0.0
    %498 = vmatpush.msra.mxu0 %v432
    %499 = vmatpush.msra.mxu0 %v431
    %500 = vmatpush.msra.mxu0 %v430
    %501 = vmatpush.msra.mxu0 %v429
    %502 = vmatmul.f32.gmra.mxu0 %v439
    %v503 = vpop.f32.mrf.mxu0
    %v504 = vadd.f32 %v435, %v503
    %505 = vmatmul.f32.gmra.mxu0 %v442
    %v506 = vpop.f32.mrf.mxu0
    %v507 = vadd.f32 %v435, %v506
    %508 = vmatmul.f32.gmra.mxu0 %v445
    %v509 = vpop.f32.mrf.mxu0
    %v510 = vadd.f32 %v435, %v509
    %511 = vmatmul.f32.gmra.mxu0 %v448
    %v512 = vpop.f32.mrf.mxu0
    %v513 = vadd.f32 %v435, %v512
    %514 = vmatmul.f32.gmra.mxu0 %v451
    %v515 = vpop.f32.mrf.mxu0
    %v516 = vadd.f32 %v435, %v515
    %517 = vmatmul.f32.gmra.mxu0 %v454
    %v518 = vpop.f32.mrf.mxu0
    %v519 = vadd.f32 %v435, %v518
    %520 = vmatmul.f32.gmra.mxu0 %v457
    %v521 = vpop.f32.mrf.mxu0
    %v522 = vadd.f32 %v435, %v521
    %523 = vmatmul.f32.gmra.mxu0 %v460
    %v524 = vpop.f32.mrf.mxu0
    %v525 = vadd.f32 %v435, %v524
    %526 = vmatmul.f32.gmra.mxu0 %v463
    %v527 = vpop.f32.mrf.mxu0
    %v528 = vadd.f32 %v435, %v527
    %529 = vmatmul.f32.gmra.mxu0 %v466
    %v530 = vpop.f32.mrf.mxu0
    %v531 = vadd.f32 %v435, %v530
    %532 = vmatmul.f32.gmra.mxu0 %v469
    %v533 = vpop.f32.mrf.mxu0
    %v534 = vadd.f32 %v435, %v533
    %535 = vmatmul.f32.gmra.mxu0 %v472
    %v536 = vpop.f32.mrf.mxu0
    %v537 = vadd.f32 %v435, %v536
    %538 = vmatmul.f32.gmra.mxu0 %v475
    %v539 = vpop.f32.mrf.mxu0
    %v540 = vadd.f32 %v435, %v539
    %541 = vmatmul.f32.gmra.mxu0 %v478
    %v542 = vpop.f32.mrf.mxu0
    %v543 = vadd.f32 %v435, %v542
    %544 = vmatmul.f32.gmra.mxu0 %v481
    %v545 = vpop.f32.mrf.mxu0
    %v546 = vadd.f32 %v435, %v545
    %547 = vmatmul.f32.gmra.mxu0 %v484
    %v548 = vpop.f32.mrf.mxu0
    %v549 = vadd.f32 %v435, %v548
    %550 = vdwg.mxu0
    %v551 = vmax.f32 %v504, 0.0
    %v552 = vmax.f32 %v507, 0.0
    %v553 = vmax.f32 %v510, 0.0
    %v554 = vmax.f32 %v513, 0.0
    %v555 = vmax.f32 %v516, 0.0
    %v556 = vmax.f32 %v519, 0.0
    %v557 = vmax.f32 %v522, 0.0
    %v558 = vmax.f32 %v525, 0.0
    %v559 = vmax.f32 %v528, 0.0
    %v560 = vmax.f32 %v531, 0.0
    %v561 = vmax.f32 %v534, 0.0
    %v562 = vmax.f32 %v537, 0.0
    %v563 = vmax.f32 %v540, 0.0
    %v564 = vmax.f32 %v543, 0.0
    %v565 = vmax.f32 %v546, 0.0
    %v566 = vmax.f32 %v549, 0.0
    %v567 = vld [vmem:[%s7] sm:$0xff]
    %v568 = vld [vmem:[%s7 + $0x8] sm:$0xff]
    %v569 = vld [vmem:[%s7 + $0x10] sm:$0xff]
    %v570 = vld [vmem:[%s7 + $0x18] sm:$0xff]
    %v571 = vld [vmem:[%s7 + $0x20] sm:$0xff]
    %v572 = vld [vmem:[%s7 + $0x28] sm:$0xff]
    %v573 = vld [vmem:[%s7 + $0x30] sm:$0xff]
    %v574 = vld [vmem:[%s7 + $0x38] sm:$0xff]
    %v575 = vld [vmem:[%s7 + $0x40] sm:$0xff]
    %v576 = vld [vmem:[%s7 + $0x48] sm:$0xff]
    %v577 = vld [vmem:[%s7 + $0x50] sm:$0xff]
    %v578 = vld [vmem:[%s7 + $0x58] sm:$0xff]
    %v579 = vld [vmem:[%s8] sm:$0x1]
    %v581 = vperm.slane %v579, 0
    %vm583 = vcmask 785408
    %v585 = vsel %vm583, %v551, 0
    %v588 = vsel %vm583, %v552, 0
    %v591 = vsel %vm583, %v553, 0
    %v594 = vsel %vm583, %v554, 0
    %v597 = vsel %vm583, %v555, 0
    %v600 = vsel %vm583, %v556, 0
    %v603 = vsel %vm583, %v557, 0
    %v606 = vsel %vm583, %v558, 0
    %v609 = vsel %vm583, %v559, 0
    %v612 = vsel %vm583, %v560, 0
    %v615 = vsel %vm583, %v561, 0
    %v618 = vsel %vm583, %v562, 0
    %v621 = vsel %vm583, %v563, 0
    %v624 = vsel %vm583, %v564, 0
    %v627 = vsel %vm583, %v565, 0
    %v630 = vsel %vm583, %v566, 0
    %632 = vmatpush.msra.mxu0 0.0
    %633 = vmatpush.msra.mxu0 0.0
    %634 = vmatpush.msra.mxu0 0.0
    %635 = vmatpush.msra.mxu0 0.0
    %636 = vmatpush.msra.mxu0 %v578
    %637 = vmatpush.msra.mxu0 %v577
    %638 = vmatpush.msra.mxu0 %v576
    %639 = vmatpush.msra.mxu0 %v575
    %640 = vmatpush.msra.mxu0 %v574
    %641 = vmatpush.msra.mxu0 %v573
    %642 = vmatpush.msra.mxu0 %v572
    %643 = vmatpush.msra.mxu0 %v571
    %644 = vmatpush.msra.mxu0 %v570
    %645 = vmatpush.msra.mxu0 %v569
    %646 = vmatpush.msra.mxu0 %v568
    %647 = vmatpush.msra.mxu0 %v567
    %648 = vmatmul.f32.gmra.mxu0 %v585
    %v649 = vpop.f32.mrf.mxu0
    %v650 = vadd.f32 %v581, %v649
    %651 = vmatmul.f32.gmra.mxu0 %v588
    %v652 = vpop.f32.mrf.mxu0
    %v653 = vadd.f32 %v581, %v652
    %654 = vmatmul.f32.gmra.mxu0 %v591
    %v655 = vpop.f32.mrf.mxu0
    %v656 = vadd.f32 %v581, %v655
    %657 = vmatmul.f32.gmra.mxu0 %v594
    %v658 = vpop.f32.mrf.mxu0
    %v659 = vadd.f32 %v581, %v658
    %660 = vmatmul.f32.gmra.mxu0 %v597
    %v661 = vpop.f32.mrf.mxu0
    %v662 = vadd.f32 %v581, %v661
    %663 = vmatmul.f32.gmra.mxu0 %v600
    %v664 = vpop.f32.mrf.mxu0
    %v665 = vadd.f32 %v581, %v664
    %666 = vmatmul.f32.gmra.mxu0 %v603
    %v667 = vpop.f32.mrf.mxu0
    %v668 = vadd.f32 %v581, %v667
    %669 = vmatmul.f32.gmra.mxu0 %v606
    %v670 = vpop.f32.mrf.mxu0
    %v671 = vadd.f32 %v581, %v670
    %672 = vmatmul.f32.gmra.mxu0 %v609
    %v673 = vpop.f32.mrf.mxu0
    %v674 = vadd.f32 %v581, %v673
    %675 = vmatmul.f32.gmra.mxu0 %v612
    %v676 = vpop.f32.mrf.mxu0
    %v677 = vadd.f32 %v581, %v676
    %678 = vmatmul.f32.gmra.mxu0 %v615
    %v679 = vpop.f32.mrf.mxu0
    %v680 = vadd.f32 %v581, %v679
    %681 = vmatmul.f32.gmra.mxu0 %v618
    %v682 = vpop.f32.mrf.mxu0
    %v683 = vadd.f32 %v581, %v682
    %684 = vmatmul.f32.gmra.mxu0 %v621
    %v685 = vpop.f32.mrf.mxu0
    %v686 = vadd.f32 %v581, %v685
    %687 = vmatmul.f32.gmra.mxu0 %v624
    %v688 = vpop.f32.mrf.mxu0
    %v689 = vadd.f32 %v581, %v688
    %690 = vmatmul.f32.gmra.mxu0 %v627
    %v691 = vpop.f32.mrf.mxu0
    %v692 = vadd.f32 %v581, %v691
    %693 = vmatmul.f32.gmra.mxu0 %v630
    %v694 = vpop.f32.mrf.mxu0
    %v695 = vadd.f32 %v581, %v694
    %696 = vdwg.mxu0
    %v697 = vmax.f32 %v650, 0.0
    %v698 = vmax.f32 %v653, 0.0
    %v699 = vmax.f32 %v656, 0.0
    %v700 = vmax.f32 %v659, 0.0
    %v701 = vmax.f32 %v662, 0.0
    %v702 = vmax.f32 %v665, 0.0
    %v703 = vmax.f32 %v668, 0.0
    %v704 = vmax.f32 %v671, 0.0
    %v705 = vmax.f32 %v674, 0.0
    %v706 = vmax.f32 %v677, 0.0
    %v707 = vmax.f32 %v680, 0.0
    %v708 = vmax.f32 %v683, 0.0
    %v709 = vmax.f32 %v686, 0.0
    %v710 = vmax.f32 %v689, 0.0
    %v711 = vmax.f32 %v692, 0.0
    %v712 = vmax.f32 %v695, 0.0
    %v713 = vld [vmem:[%s9] sm:$0xff]
    %v714 = vld [vmem:[%s9 + $0x8] sm:$0xff]
    %v715 = vld [vmem:[%s9 + $0x10] sm:$0xff]
    %v716 = vld [vmem:[%s9 + $0x18] sm:$0xff]
    %v717 = vld [vmem:[%s9 + $0x20] sm:$0xff]
    %v718 = vld [vmem:[%s9 + $0x28] sm:$0xff]
    %v719 = vld [vmem:[%s9 + $0x30] sm:$0xff]
    %v720 = vld [vmem:[%s9 + $0x38] sm:$0xff]
    %v721 = vld [vmem:[%s10] sm:$0x1]
    %v723 = vperm.slane %v721, 0
    %vm725 = vcmask 523264
    %v727 = vsel %vm725, %v697, 0
    %v730 = vsel %vm725, %v698, 0
    %v733 = vsel %vm725, %v699, 0
    %v736 = vsel %vm725, %v700, 0
    %v739 = vsel %vm725, %v701, 0
    %v742 = vsel %vm725, %v702, 0
    %v745 = vsel %vm725, %v703, 0
    %v748 = vsel %vm725, %v704, 0
    %v751 = vsel %vm725, %v705, 0
    %v754 = vsel %vm725, %v706, 0
    %v757 = vsel %vm725, %v707, 0
    %v760 = vsel %vm725, %v708, 0
    %v763 = vsel %vm725, %v709, 0
    %v766 = vsel %vm725, %v710, 0
    %v769 = vsel %vm725, %v711, 0
    %v772 = vsel %vm725, %v712, 0
    %774 = vmatpush.msra.mxu0 0.0
    %775 = vmatpush.msra.mxu0 0.0
    %776 = vmatpush.msra.mxu0 0.0
    %777 = vmatpush.msra.mxu0 0.0
    %778 = vmatpush.msra.mxu0 0.0
    %779 = vmatpush.msra.mxu0 0.0
    %780 = vmatpush.msra.mxu0 0.0
    %781 = vmatpush.msra.mxu0 0.0
    %782 = vmatpush.msra.mxu0 %v720
    %783 = vmatpush.msra.mxu0 %v719
    %784 = vmatpush.msra.mxu0 %v718
    %785 = vmatpush.msra.mxu0 %v717
    %786 = vmatpush.msra.mxu0 %v716
    %787 = vmatpush.msra.mxu0 %v715
    %788 = vmatpush.msra.mxu0 %v714
    %789 = vmatpush.msra.mxu0 %v713
    %790 = vmatmul.f32.gmra.mxu0 %v727
    %v791 = vpop.f32.mrf.mxu0
    %v792 = vadd.f32 %v723, %v791
    %793 = vmatmul.f32.gmra.mxu0 %v730
    %v794 = vpop.f32.mrf.mxu0
    %v795 = vadd.f32 %v723, %v794
    %796 = vmatmul.f32.gmra.mxu0 %v733
    %v797 = vpop.f32.mrf.mxu0
    %v798 = vadd.f32 %v723, %v797
    %799 = vmatmul.f32.gmra.mxu0 %v736
    %v800 = vpop.f32.mrf.mxu0
    %v801 = vadd.f32 %v723, %v800
    %802 = vmatmul.f32.gmra.mxu0 %v739
    %v803 = vpop.f32.mrf.mxu0
    %v804 = vadd.f32 %v723, %v803
    %805 = vmatmul.f32.gmra.mxu0 %v742
    %v806 = vpop.f32.mrf.mxu0
    %v807 = vadd.f32 %v723, %v806
    %808 = vmatmul.f32.gmra.mxu0 %v745
    %v809 = vpop.f32.mrf.mxu0
    %v810 = vadd.f32 %v723, %v809
    %811 = vmatmul.f32.gmra.mxu0 %v748
    %v812 = vpop.f32.mrf.mxu0
    %v813 = vadd.f32 %v723, %v812
    %814 = vmatmul.f32.gmra.mxu0 %v751
    %v815 = vpop.f32.mrf.mxu0
    %v816 = vadd.f32 %v723, %v815
    %817 = vmatmul.f32.gmra.mxu0 %v754
    %v818 = vpop.f32.mrf.mxu0
    %v819 = vadd.f32 %v723, %v818
    %820 = vmatmul.f32.gmra.mxu0 %v757
    %v821 = vpop.f32.mrf.mxu0
    %v822 = vadd.f32 %v723, %v821
    %823 = vmatmul.f32.gmra.mxu0 %v760
    %v824 = vpop.f32.mrf.mxu0
    %v825 = vadd.f32 %v723, %v824
    %826 = vmatmul.f32.gmra.mxu0 %v763
    %v827 = vpop.f32.mrf.mxu0
    %v828 = vadd.f32 %v723, %v827
    %829 = vmatmul.f32.gmra.mxu0 %v766
    %v830 = vpop.f32.mrf.mxu0
    %v831 = vadd.f32 %v723, %v830
    %832 = vmatmul.f32.gmra.mxu0 %v769
    %v833 = vpop.f32.mrf.mxu0
    %v834 = vadd.f32 %v723, %v833
    %835 = vmatmul.f32.gmra.mxu0 %v772
    %v836 = vpop.f32.mrf.mxu0
    %v837 = vadd.f32 %v723, %v836
    %838 = vdwg.mxu0
    %v839 = vld [vmem:[%s11] sm:$0xff]
    %v840 = vld [vmem:[%s11 + $0x8] sm:$0xff]
    %v841 = vld [vmem:[%s11 + $0x10] sm:$0xff]
    %v842 = vld [vmem:[%s11 + $0x18] sm:$0xff]
    %v843 = vld [vmem:[%s11 + $0x20] sm:$0xff]
    %v844 = vld [vmem:[%s11 + $0x28] sm:$0xff]
    %v845 = vld [vmem:[%s11 + $0x30] sm:$0xff]
    %v846 = vld [vmem:[%s11 + $0x38] sm:$0xff]
    %v847 = vld [vmem:[%s12] sm:$0xff]
    %v848 = vld [vmem:[%s12 + $0x8] sm:$0xff]
    %v849 = vld [vmem:[%s12 + $0x10] sm:$0xff]
    %v850 = vld [vmem:[%s12 + $0x18] sm:$0xff]
    %v851 = vld [vmem:[%s12 + $0x20] sm:$0xff]
    %v852 = vld [vmem:[%s12 + $0x28] sm:$0xff]
    %v853 = vld [vmem:[%s12 + $0x30] sm:$0xff]
    %v854 = vld [vmem:[%s12 + $0x38] sm:$0xff]
    %856 = vset.pattern.permute.xlu0 0
    %857 = vperm.xlu0 %856, %v847
    %v858 = vpop.permute.xlu0 %857
    %861 = vset.pattern.permute.xlu0 0
    %862 = vperm.xlu0 %861, %v848
    %v863 = vpop.permute.xlu0 %862
    %866 = vset.pattern.permute.xlu0 0
    %867 = vperm.xlu0 %866, %v849
    %v868 = vpop.permute.xlu0 %867
    %871 = vset.pattern.permute.xlu0 0
    %872 = vperm.xlu0 %871, %v850
    %v873 = vpop.permute.xlu0 %872
    %876 = vset.pattern.permute.xlu0 0
    %877 = vperm.xlu0 %876, %v851
    %v878 = vpop.permute.xlu0 %877
    %881 = vset.pattern.permute.xlu0 0
    %882 = vperm.xlu0 %881, %v852
    %v883 = vpop.permute.xlu0 %882
    %886 = vset.pattern.permute.xlu0 0
    %887 = vperm.xlu0 %886, %v853
    %v888 = vpop.permute.xlu0 %887
    %891 = vset.pattern.permute.xlu0 0
    %892 = vperm.xlu0 %891, %v854
    %v893 = vpop.permute.xlu0 %892
    %895 = vmatpush.msra.mxu0 %v837
    %896 = vmatpush.msra.mxu0 %v834
    %897 = vmatpush.msra.mxu0 %v831
    %898 = vmatpush.msra.mxu0 %v828
    %899 = vmatpush.msra.mxu0 %v825
    %900 = vmatpush.msra.mxu0 %v822
    %901 = vmatpush.msra.mxu0 %v819
    %902 = vmatpush.msra.mxu0 %v816
    %903 = vmatpush.msra.mxu0 %v813
    %904 = vmatpush.msra.mxu0 %v810
    %905 = vmatpush.msra.mxu0 %v807
    %906 = vmatpush.msra.mxu0 %v804
    %907 = vmatpush.msra.mxu0 %v801
    %908 = vmatpush.msra.mxu0 %v798
    %909 = vmatpush.msra.mxu0 %v795
    %910 = vmatpush.msra.mxu0 %v792
    %911 = vmatmul.f32.gmra.mxu0 %v839
    %v912 = vpop.f32.mrf.mxu0
    %v913 = vadd.f32 %v858, %v912
    %914 = vmatmul.f32.gmra.mxu0 %v840
    %v915 = vpop.f32.mrf.mxu0
    %v916 = vadd.f32 %v863, %v915
    %917 = vmatmul.f32.gmra.mxu0 %v841
    %v918 = vpop.f32.mrf.mxu0
    %v919 = vadd.f32 %v868, %v918
    %920 = vmatmul.f32.gmra.mxu0 %v842
    %v921 = vpop.f32.mrf.mxu0
    %v922 = vadd.f32 %v873, %v921
    %923 = vmatmul.f32.gmra.mxu0 %v843
    %v924 = vpop.f32.mrf.mxu0
    %v925 = vadd.f32 %v878, %v924
    %926 = vmatmul.f32.gmra.mxu0 %v844
    %v927 = vpop.f32.mrf.mxu0
    %v928 = vadd.f32 %v883, %v927
    %929 = vmatmul.f32.gmra.mxu0 %v845
    %v930 = vpop.f32.mrf.mxu0
    %v931 = vadd.f32 %v888, %v930
    %932 = vmatmul.f32.gmra.mxu0 %v846
    %v933 = vpop.f32.mrf.mxu0
    %v934 = vadd.f32 %v893, %v933
    %935 = vdwg.mxu0
    %936 = vst.msk [vmem:[%s17] sm:$0xff] %vm175, %v913
    %937 = vst.msk [vmem:[%s17 + $0x8] sm:$0xff] %vm175, %v916
    %938 = vst.msk [vmem:[%s17 + $0x10] sm:$0xff] %vm175, %v919
    %939 = vst.msk [vmem:[%s17 + $0x18] sm:$0xff] %vm175, %v922
    %940 = vst.msk [vmem:[%s17 + $0x20] sm:$0xff] %vm175, %v925
    %941 = vst.msk [vmem:[%s17 + $0x28] sm:$0xff] %vm175, %v928
    %942 = vst.msk [vmem:[%s17 + $0x30] sm:$0xff] %vm175, %v931
    %943 = vst.msk [vmem:[%s17 + $0x38] sm:$0xff] %vm175, %v934
    %v944 = vld [vmem:[%s13] sm:$0xff]
    %v945 = vld [vmem:[%s13 + $0x8] sm:$0xff]
    %946 = vmatpush.msra.mxu0 %v155
    %947 = vmatpush.msra.mxu0 %v152
    %948 = vmatpush.msra.mxu0 %v149
    %949 = vmatpush.msra.mxu0 %v146
    %950 = vmatpush.msra.mxu0 %v143
    %951 = vmatpush.msra.mxu0 %v140
    %952 = vmatpush.msra.mxu0 %v137
    %953 = vmatpush.msra.mxu0 %v134
    %954 = vmatpush.msra.mxu0 %v131
    %955 = vmatpush.msra.mxu0 %v128
    %956 = vmatpush.msra.mxu0 %v125
    %957 = vmatpush.msra.mxu0 %v122
    %958 = vmatpush.msra.mxu0 %v119
    %959 = vmatpush.msra.mxu0 %v116
    %960 = vmatpush.msra.mxu0 %v113
    %961 = vmatpush.msra.mxu0 %v110
    %962 = vmatmul.f32.gmra.mxu0 %v944
    %v963 = vpop.f32.mrf.mxu0
    %v964 = vadd.f32 0.0, %v963
    %965 = vmatmul.f32.gmra.mxu0 %v945
    %v966 = vpop.f32.mrf.mxu0
    %v967 = vadd.f32 0.0, %v966
    %968 = vdwg.mxu0
    %v969 = vld [vmem:[%s14] sm:$0xf]
    %v970 = vld [vmem:[%s15] sm:$0x1]
    %v972 = vperm.slane %v970, 0
    %v975 = vsel %vm175, %v964, 0
    %v978 = vsel %vm175, %v967, 0
    %v981 = vsel %vm224, %v969, 0
    %983 = vmatpush.msra.mxu0 0.0
    %984 = vmatpush.msra.mxu0 0.0
    %985 = vmatpush.msra.mxu0 0.0
    %986 = vmatpush.msra.mxu0 0.0
    %987 = vmatpush.msra.mxu0 0.0
    %988 = vmatpush.msra.mxu0 0.0
    %989 = vmatpush.msra.mxu0 0.0
    %990 = vmatpush.msra.mxu0 0.0
    %991 = vmatpush.msra.mxu0 0.0
    %992 = vmatpush.msra.mxu0 0.0
    %993 = vmatpush.msra.mxu0 0.0
    %994 = vmatpush.msra.mxu0 0.0
    %995 = vmatpush.msra.mxu0 0.0
    %996 = vmatpush.msra.mxu0 0.0
    %997 = vmatpush.msra.mxu0 0.0
    %998 = vmatpush.msra.mxu0 %v981
    %999 = vmatmul.f32.gmra.mxu0 %v975
    %v1000 = vpop.f32.mrf.mxu0
    %v1001 = vadd.f32 %v972, %v1000
    %1002 = vmatmul.f32.gmra.mxu0 %v978
    %v1003 = vpop.f32.mrf.mxu0
    %v1004 = vadd.f32 %v972, %v1003
    %1005 = vdwg.mxu0
    %vm1006 = vcmask 39936
    %v1007 = vsel %vm1006, %v1001, -inf
    %1008 = vmax.xlane.f32.xlu0 %v1007
    %v1009 = vpop.xlane.xlu0 %1008
    %v1010 = vsel %vm1006, %v1004, -inf
    %1011 = vmax.xlane.f32.xlu0 %v1010
    %v1012 = vpop.xlane.xlu0 %1011
    %v1013 = vsub.f32 %v1001, %v1009
    %v1014 = vsub.f32 %v1004, %v1012
    %v1015 = vmul.f32 %v1013, 1.442695
    %v1016 = vpow.pop %v1015
    %v1017 = vmul.f32 %v1014, 1.442695
    %v1018 = vpow.pop %v1017
    %v1019 = vsel %vm1006, %v1016, 0.0
    %1020 = vadd.xlane.f32.xlu0 %v1019
    %v1021 = vpop.xlane.xlu0 %1020
    %v1022 = vsel %vm1006, %v1018, 0.0
    %1023 = vadd.xlane.f32.xlu0 %v1022
    %v1024 = vpop.xlane.xlu0 %1023
    %v1025 = vrcp.pop %v1021
    %v1026 = vmul.f32 %v1021, %v1025
    %v1027 = vsub.f32 1.0, %v1026
    %v1028 = vmul.f32 %v1025, %v1027
    %v1029 = vadd.f32 %v1025, %v1028
    %vm1030 = vweird.f32 %v1021
    %vm1031 = vweird.f32 %v1025
    %vm1032 = vmor %vm1030, %vm1031
    %v1033 = vsel %vm1032, %v1025, %v1029
    %v1034 = vand.u32 2147483647, %v1021
    %vm1035 = vcmp.eq.f32.partialorder %v1034, 8.507059e+37
    %v1036 = vand.u32 %v1021, 2147483648
    %v1037 = vor.u32 1.1754944e-38, %v1036
    %v1038 = vsel %vm1035, %v1037, %v1033
    %v1039 = vmul.f32 %v1016, %v1038
    %v1040 = vrcp.pop %v1024
    %v1041 = vmul.f32 %v1024, %v1040
    %v1042 = vsub.f32 1.0, %v1041
    %v1043 = vmul.f32 %v1040, %v1042
    %v1044 = vadd.f32 %v1040, %v1043
    %vm1045 = vweird.f32 %v1024
    %vm1046 = vweird.f32 %v1040
    %vm1047 = vmor %vm1045, %vm1046
    %v1048 = vsel %vm1047, %v1040, %v1044
    %v1049 = vand.u32 2147483647, %v1024
    %vm1050 = vcmp.eq.f32.partialorder %v1049, 8.507059e+37
    %v1051 = vand.u32 %v1024, 2147483648
    %v1052 = vor.u32 1.1754944e-38, %v1051
    %v1053 = vsel %vm1050, %v1052, %v1048
    %v1054 = vmul.f32 %v1018, %v1053
    %1055 = vst.msk [vmem:[%s18] sm:$0xff] %vm1006, %v1039
    %1056 = vst.msk [vmem:[%s18 + $0x8] sm:$0xff] %vm1006, %v1054
    %v1057 = vld [vmem:[%s16] sm:$0xff]
    %v1058 = vld [vmem:[%s16 + $0x8] sm:$0xff]
    %v1059 = vld [vmem:[%s16 + $0x10] sm:$0xff]
    %v1060 = vld [vmem:[%s16 + $0x18] sm:$0xff]
    %v1061 = vld [vmem:[%s16 + $0x20] sm:$0xff]
    %v1062 = vld [vmem:[%s16 + $0x28] sm:$0xff]
    %v1063 = vld [vmem:[%s16 + $0x30] sm:$0xff]
    %v1064 = vld [vmem:[%s16 + $0x38] sm:$0xff]
    %v1065 = vld [vmem:[%s16 + $0x40] sm:$0xff]
    %v1066 = vld [vmem:[%s16 + $0x48] sm:$0xff]
    %v1067 = vld [vmem:[%s16 + $0x50] sm:$0xff]
    %v1068 = vld [vmem:[%s16 + $0x58] sm:$0xff]
    %v1069 = vld [vmem:[%s16 + $0x60] sm:$0xff]
    %v1070 = vld [vmem:[%s16 + $0x68] sm:$0xff]
    %v1071 = vld [vmem:[%s16 + $0x70] sm:$0xff]
    %v1072 = vld [vmem:[%s16 + $0x78] sm:$0xff]
    %v1073 = vsub.f32 %v1057, %v157
    %v1074 = vsub.f32 %v1058, %v158
    %v1075 = vsub.f32 %v1059, %v159
    %v1076 = vsub.f32 %v1060, %v160
    %v1077 = vsub.f32 %v1061, %v161
    %v1078 = vsub.f32 %v1062, %v162
    %v1079 = vsub.f32 %v1063, %v163
    %v1080 = vsub.f32 %v1064, %v164
    %v1081 = vsub.f32 %v1065, %v165
    %v1082 = vsub.f32 %v1066, %v166
    %v1083 = vsub.f32 %v1067, %v167
    %v1084 = vsub.f32 %v1068, %v168
    %v1085 = vsub.f32 %v1069, %v169
    %v1086 = vsub.f32 %v1070, %v170
    %v1087 = vsub.f32 %v1071, %v171
    %v1088 = vsub.f32 %v1072, %v172
    %v1089 = vmul.f32 %v1073, %v1073
    %v1090 = vmul.f32 %v1074, %v1074
    %v1091 = vmul.f32 %v1075, %v1075
    %v1092 = vmul.f32 %v1076, %v1076
    %v1093 = vmul.f32 %v1077, %v1077
    %v1094 = vmul.f32 %v1078, %v1078
    %v1095 = vmul.f32 %v1079, %v1079
    %v1096 = vmul.f32 %v1080, %v1080
    %v1097 = vmul.f32 %v1081, %v1081
    %v1098 = vmul.f32 %v1082, %v1082
    %v1099 = vmul.f32 %v1083, %v1083
    %v1100 = vmul.f32 %v1084, %v1084
    %v1101 = vmul.f32 %v1085, %v1085
    %v1102 = vmul.f32 %v1086, %v1086
    %v1103 = vmul.f32 %v1087, %v1087
    %v1104 = vmul.f32 %v1088, %v1088
    %v1105 = vsel %vm175, %v1089, 0.0
    %v1106 = vsel %vm175, %v1090, 0.0
    %v1107 = vadd.f32 %v1105, %v1106
    %v1108 = vsel %vm175, %v1091, 0.0
    %v1109 = vadd.f32 %v1107, %v1108
    %v1110 = vsel %vm175, %v1092, 0.0
    %v1111 = vadd.f32 %v1109, %v1110
    %v1112 = vsel %vm175, %v1093, 0.0
    %v1113 = vadd.f32 %v1111, %v1112
    %v1114 = vsel %vm175, %v1094, 0.0
    %v1115 = vadd.f32 %v1113, %v1114
    %v1116 = vsel %vm175, %v1095, 0.0
    %v1117 = vadd.f32 %v1115, %v1116
    %v1118 = vsel %vm175, %v1096, 0.0
    %v1119 = vadd.f32 %v1117, %v1118
    %v1120 = vsel %vm175, %v1097, 0.0
    %v1121 = vadd.f32 %v1119, %v1120
    %v1122 = vsel %vm175, %v1098, 0.0
    %v1123 = vadd.f32 %v1121, %v1122
    %v1124 = vsel %vm175, %v1099, 0.0
    %v1125 = vadd.f32 %v1123, %v1124
    %v1126 = vsel %vm175, %v1100, 0.0
    %v1127 = vadd.f32 %v1125, %v1126
    %v1128 = vsel %vm175, %v1101, 0.0
    %v1129 = vadd.f32 %v1127, %v1128
    %v1130 = vsel %vm175, %v1102, 0.0
    %v1131 = vadd.f32 %v1129, %v1130
    %v1132 = vsel %vm175, %v1103, 0.0
    %v1133 = vadd.f32 %v1131, %v1132
    %v1134 = vsel %vm175, %v1104, 0.0
    %v1135 = vadd.f32 %v1133, %v1134
    %1136 = vadd.xlane.f32.xlu0 %v1135
    %v1137 = vpop.xlane.xlu0 %1136
    %v1138 = vrot.slane %v1137, 4
    %v1139 = vadd.f32 %v1137, %v1138
    %v1140 = vrot.slane %v1139, 2
    %v1141 = vadd.f32 %v1139, %v1140
    %v1142 = vrot.slane %v1141, 1
    %v1143 = vadd.f32 %v1141, %v1142
    %s1144 = vtos %v1143
    %v1145 = vstv %s1144
    %vm1146 = vcmask 0
    %1147 = vst.msk [vmem:[#allocation2] sm:$0x1] %vm1146, %v1145
    // Predicated region
    $region70: #{model_forward.1} parent=1 // pred_check
      _
    $region71: #{model_forward.1} parent=1 // pred_check_branch
      %1149 = sbr.rel (0) target = $region73
    $region72: #{model_forward.1} parent=1 // pred_region
      _
    $region73: #{model_forward.1} parent=1 // pred_fallthru
      _
    // Predicated region
    $region74: #{model_forward.1} parent=1 // pred_check
      _
    $region75: #{model_forward.1} parent=1 // pred_check_branch
      %1151 = sbr.rel (0) target = $region77
    $region76: #{model_forward.1} parent=1 // pred_region
      _
    $region77: #{model_forward.1} parent=1 // pred_fallthru
      _
    // Predicated region
    $region78: #{model_forward.1} parent=1 // pred_check
      _
    $region79: #{model_forward.1} parent=1 // pred_check_branch
      %1153 = sbr.rel (0) target = $region81
    $region80: #{model_forward.1} parent=1 // pred_region
      %1155 = vsyncadd [#allocation3], 0
      %s1157 = sshll.u32 [#allocation2], 4
      %s1158 = int_to_ptr.vmem [resolvable:$true] %s1157
      %s1159 = sshll.u32 %s19, 4
      %s1160 = int_to_ptr.hbm [resolvable:$true] %s1159
      %1162 = dma.vmem_to_hbm [thread:$0]  %s1158, 16, %s1160, [#allocation3]
    $region81: #{model_forward.1} parent=1 // pred_fallthru
      _
    // Predicated region
    $region82: #{model_forward.1} parent=1 // pred_check
      _
    $region83: #{model_forward.1} parent=1 // pred_check_branch
      %1164 = sbr.rel (0) target = $region85
    $region84: #{model_forward.1} parent=1 // pred_region
      _
    $region85: #{model_forward.1} parent=1 // pred_fallthru
      _
    // Predicated region
    $region86: #{model_forward.1} parent=1 // pred_check
      _
    $region87: #{model_forward.1} parent=1 // pred_check_branch
      %1166 = sbr.rel (0) target = $region89
    $region88: #{model_forward.1} parent=1 // pred_region
      _
    $region89: #{model_forward.1} parent=1 // pred_fallthru
      _
    // Predicated region
    $region90: #{model_forward.1} parent=1 // pred_check
      _
    $region91: #{model_forward.1} parent=1 // pred_check_branch
      %1168 = sbr.rel (0) target = $region93
    $region92: #{model_forward.1} parent=1 // pred_region
      %1170 = dma.done [#allocation3], 16
    $region93: #{model_forward.1} parent=1 // pred_fallthru
      _
    %1171 = vsyncpa [#allocation3], 1

</llo_original>
